<compile_context>
chip_gen: v7x
topology: tpu7x:2x2x1
jax: 0.10.0
libtpu: 0.0.40
codegen_flags: <defaults>
</compile_context>

<pallas_src>
import math

import numpy as np
import jax
import jax.numpy as jnp
from jax import lax
from jax.experimental import pallas as pl
from jax.experimental.pallas import tpu as pltpu


# ---------------------------------------------------------------------------
# Fused GELU (exact-erf semantics, odd-symmetry formulation, constants folded)
# ---------------------------------------------------------------------------
# gelu(y) = 0.5*y*(1 + erf(y/sqrt(2)))
# With the Abramowitz & Stegun 7.1.26 erf approximation (|err| <= 1.5e-7):
#   erf(z) = sign(z) * (1 - poly(t) * exp(-z^2)),  t = 1/(1 + p*|z|)
# folding z = y/sqrt(2) and the 0.5 into the coefficients gives
#   gelu(y) = max(y, 0) - |y| * poly'(t) * exp(-0.5*y^2)
#   t = 1 / (1 + (p/sqrt(2)) * |y|),   poly' = 0.5 * poly
# This removes the sign/where/extra-mul chain (VALU is the saturating slot in
# the fused epilogue); exp / reciprocal stay on the EUP.
_P_OVER_SQRT2 = 0.3275911 / math.sqrt(2.0)
_H1 = 0.5 * 0.254829592
_H2 = 0.5 * -0.284496736
_H3 = 0.5 * 1.421413741
_H4 = 0.5 * -1.453152027
_H5 = 0.5 * 1.061405429


def _gelu_exact(y):
    ay = jnp.abs(y)
    t = pl.reciprocal(1.0 + _P_OVER_SQRT2 * ay, approx=True)   # EUP slot
    poly = ((((_H5 * t + _H4) * t + _H3) * t + _H2) * t + _H1) * t
    return jnp.maximum(y, 0.0) - ay * poly * jnp.exp(-0.5 * (y * y))


# ---------------------------------------------------------------------------
# Kernels
# ---------------------------------------------------------------------------
def _make_norm_act_kernel(eps):
    def kernel(x_ref, w_ref, cb_ref, g_ref, b_ref, s_ref, e_ref, o_ref):
        # x_ref: (TN, C_in) bf16 rows          w_ref: (C_in, K*C_out) bf16
        # cb/g/b_ref: (1, K*C_out) f32         s_ref: (KC, K) f32 group-mean
        # e_ref: (K, KC) f32 0/1 broadcast     o_ref: (TN, KC) bf16
        y = jnp.dot(x_ref[...], w_ref[...], preferred_element_type=jnp.float32)
        y = y + cb_ref[...]
        # LayerNormNd over the channel axis of each output voxel (C_out-wide
        # column group).  Rank-K factorization of the block-diagonal averaging
        # matrix: (TN,KC)@(KC,K) group means, then (TN,K)@(K,KC) broadcast.
        # ~C_out/2 fewer MXU MACs than the dense (KC,KC) form; stays in f32.
        u = jnp.dot(jnp.dot(y, s_ref[...], preferred_element_type=jnp.float32),
                    e_ref[...], preferred_element_type=jnp.float32)
        d = y - u
        v = jnp.dot(jnp.dot(d * d, s_ref[...], preferred_element_type=jnp.float32),
                    e_ref[...], preferred_element_type=jnp.float32)
        z = d * lax.rsqrt(v + eps)              # rsqrt -> EUP slot
        z = g_ref[...] * z + b_ref[...]
        o_ref[...] = _gelu_exact(z).astype(o_ref.dtype)
    return kernel


def _conv_last_kernel(x_ref, w_ref, cb_ref, o_ref):
    # Last stage: ConvTranspose only.  Its output width K*C_out is typically
    # < 128 lanes, so store it transposed (channel/offset-major rows,
    # voxel-major lanes) for lane-dense stores; the XLU is idle here.
    y = jnp.dot(x_ref[...], w_ref[...], preferred_element_type=jnp.float32)
    y = y + cb_ref[...]
    o_ref[...] = y.T.astype(o_ref.dtype)


# ---------------------------------------------------------------------------
# Tiling helpers
# ---------------------------------------------------------------------------
def _num_tensorcores():
    # v7x exposes 2 TensorCores per chip (megacore); v5e/v6e have 1.
    try:
        info = pltpu.get_tpu_info()
        for name in ("num_cores", "core_count", "num_tensorcores",
                     "tensorcore_count", "cores_per_chip"):
            v = getattr(info, name, None)
            if isinstance(v, int) and v > 0:
                return v
    except Exception:
        pass
    return 1


def _pick_tn(n, target, row_align, num_cores):
    """Row-tile size.  Single max-size tile on 1-TC chips (v5e/v6e: grid steps
    are a serial loop, ~600 cycles each); even 2-way split on multi-TC chips
    (v7x) so both cores get work; `target`-sized tiles otherwise.  Per-step
    VMEM at target=1024 is well under every generation's limit."""
    if n <= target:
        if (num_cores >= 2 and n >= 2 * row_align and n % 2 == 0
                and (n // 2) % row_align == 0):
            return n // 2
        return n
    return max((target // row_align) * row_align, row_align)


def _bspec(shape, index_map, deep_pipeline):
    if deep_pipeline:
        # Extra pipeline depth on the streaming operands of mem-bound stages.
        return pl.BlockSpec(shape, index_map, pipeline_mode=pl.Buffered(3))
    return pl.BlockSpec(shape, index_map)


_CPARAMS = pltpu.CompilerParams(dimension_semantics=("parallel",),
                                vmem_limit_bytes=32 * 1024 * 1024)


# ---------------------------------------------------------------------------
# Per-stage pallas_call wrappers (rows layout, deferred interleave)
# ---------------------------------------------------------------------------
def _decode_stage_mid(x_rows, stage, eps, tn_target, num_cores):
    """ConvTranspose3d (kernel=stride) + LayerNormNd + GELU on rows.
    x_rows: (N, C_in) bf16.  Returns (N, K*C_out) bf16 (K-major columns)."""
    N, C_in = x_rows.shape
    w, cb = stage["w"], stage["cb"]
    s0, s1, s2 = stage["stride"]
    C_out = w.shape[1]
    K = s0 * s1 * s2
    KC = K * C_out

    tn = _pick_tn(N, tn_target, 8, num_cores)
    n_pad = -(-N // tn) * tn
    x_in = x_rows
    if n_pad != N:   # fallback only; tn divides N in the common case
        x_in = jnp.pad(x_rows, ((0, n_pad - N), (0, 0)))
    n_blocks = n_pad // tn
    deep = n_blocks >= 3

    # Fold kernel offsets into output columns: (C_in, C_out, s0, s1, s2)
    # -> (C_in, K*C_out), K-major / C_out-minor.  bf16 matmul operands.
    w_fold = jnp.transpose(w, (0, 2, 3, 4, 1)).reshape(C_in, KC).astype(jnp.bfloat16)
    cb_full = jnp.tile(cb, K)[None, :]
    g_full = jnp.tile(stage["ln_w"], K)[None, :]
    b_full = jnp.tile(stage["ln_b"], K)[None, :]
    # Rank-K factors of the block-diagonal averaging matrix.
    S = jnp.asarray(np.kron(np.eye(K, dtype=np.float32),
                            np.full((C_out, 1), 1.0 / C_out, dtype=np.float32)))
    E = jnp.asarray(np.kron(np.eye(K, dtype=np.float32),
                            np.ones((1, C_out), dtype=np.float32)))

    out = pl.pallas_call(
        _make_norm_act_kernel(eps),
        out_shape=jax.ShapeDtypeStruct((n_pad, KC), jnp.bfloat16),
        grid=(n_blocks,),
        in_specs=[
            _bspec((tn, C_in), lambda i: (i, 0), deep),
            pl.BlockSpec((C_in, KC), lambda i: (0, 0)),
            pl.BlockSpec((1, KC), lambda i: (0, 0)),
            pl.BlockSpec((1, KC), lambda i: (0, 0)),
            pl.BlockSpec((1, KC), lambda i: (0, 0)),
            pl.BlockSpec((KC, K), lambda i: (0, 0)),
            pl.BlockSpec((K, KC), lambda i: (0, 0)),
        ],
        out_specs=_bspec((tn, KC), lambda i: (i, 0), deep),
        compiler_params=_CPARAMS,
    )(x_in, w_fold, cb_full, g_full, b_full, S, E)
    return out[:N] if n_pad != N else out


def _decode_stage_last(x_rows, stage, tn_target, num_cores):
    """Final ConvTranspose3d (no norm/act).  Returns the TRANSPOSED result
    (K*C_out, N) in f32 so the store is lane-dense (output width < 128)."""
    N, C_in = x_rows.shape
    w, cb = stage["w"], stage["cb"]
    s0, s1, s2 = stage["stride"]
    C_out = w.shape[1]
    K = s0 * s1 * s2
    KC = K * C_out

    tn = _pick_tn(N, tn_target, 128, num_cores)
    n_pad = -(-N // tn) * tn
    x_in = x_rows
    if n_pad != N:
        x_in = jnp.pad(x_rows, ((0, n_pad - N), (0, 0)))
    n_blocks = n_pad // tn
    deep = n_blocks >= 3

    w_fold = jnp.transpose(w, (0, 2, 3, 4, 1)).reshape(C_in, KC).astype(jnp.bfloat16)
    cb_full = jnp.tile(cb, K)[None, :]

    out = pl.pallas_call(
        _conv_last_kernel,
        out_shape=jax.ShapeDtypeStruct((KC, n_pad), jnp.float32),
        grid=(n_blocks,),
        in_specs=[
            _bspec((tn, C_in), lambda i: (i, 0), deep),
            pl.BlockSpec((C_in, KC), lambda i: (0, 0)),
            pl.BlockSpec((1, KC), lambda i: (0, 0)),
        ],
        out_specs=_bspec((KC, tn), lambda i: (0, i), deep),
        compiler_params=_CPARAMS,
    )(x_in, w_fold, cb_full)
    return out[:, :N] if n_pad != N else out


# ---------------------------------------------------------------------------
# Deferred-permutation assembly into NCDHW
# ---------------------------------------------------------------------------
def _assemble_ncdhw(outT, spatial0, strides_list, C_out):
    """outT: (sL0*sL1*sL2*C_out, B*D0*H0*W0*prod(K_j, j<L)).  Row ordering of
    the lane axis is [b, d0, h0, w0, k1_*, ..., k_{L-1}_*]; the sublane axis is
    [kL_0, kL_1, kL_2, c].  One combined transpose produces NCDHW."""
    B, D0, H0, W0 = spatial0
    L = len(strides_list)
    sL = strides_list[-1]
    dims = list(sL) + [C_out, B, D0, H0, W0]
    for s in strides_list[:-1]:
        dims.extend(s)
    y = outT.reshape(dims)

    def koff(j, a):            # kernel-offset axis of (0-indexed) stage j < L-1
        return 8 + 3 * j + a

    perm = ([4, 3, 5] + [koff(j, 0) for j in range(L - 1)] + [0]
            + [6] + [koff(j, 1) for j in range(L - 1)] + [1]
            + [7] + [koff(j, 2) for j in range(L - 1)] + [2])
    y = jnp.transpose(y, perm)
    Df = D0 * int(np.prod([s[0] for s in strides_list]))
    Hf = H0 * int(np.prod([s[1] for s in strides_list]))
    Wf = W0 * int(np.prod([s[2] for s in strides_list]))
    return y.reshape(B, C_out, Df, Hf, Wf)


# ---------------------------------------------------------------------------
# Parameters (mirrors PatchDecode.__init__) and forward pass
# ---------------------------------------------------------------------------
def _round_to_8(inp):
    return int(max(8, np.round((inp + 1e-06) / 8) * 8))


def build_patch_decode(key, patch_size, embed_dim, out_channels):
    num_stages = int(np.log(max(patch_size)) / np.log(2))
    strides = [[2 if p / 2 ** n % 2 == 0 else 1 for p in patch_size]
               for n in range(num_stages)][::-1]
    dim_red = (embed_dim / (2 * out_channels)) ** (1 / num_stages)
    channels = [embed_dim] + [_round_to_8(embed_dim / dim_red ** (x + 1))
                              for x in range(num_stages)]
    channels[-1] = out_channels

    stages = []
    for s in range(num_stages):
        c_in, c_out = channels[s], channels[s + 1]
        st = tuple(strides[s])
        key, kw, kb = jax.random.split(key, 3)
        fan = c_out * st[0] * st[1] * st[2]
        bound = 1.0 / math.sqrt(max(fan, 1))
        w = jax.random.uniform(kw, (c_in, c_out) + st, jnp.float32,
                               minval=-bound, maxval=bound)
        cb = jax.random.uniform(kb, (c_out,), jnp.float32,
                                minval=-bound, maxval=bound)
        stages.append(dict(
            w=w, cb=cb,
            ln_w=jnp.ones((c_out,), jnp.float32),    # LayerNormNd init: ones
            ln_b=jnp.zeros((c_out,), jnp.float32),   # LayerNormNd init: zeros
            stride=st,
            norm_act=(s < num_stages - 1),           # last stage: conv only
        ))
    return stages


def patch_decode_forward(x, stages, eps=1e-6, tn_target=1024):
    B, C, D0, H0, W0 = x.shape
    num_cores = _num_tensorcores()
    # Enter channels-last rows layout once; matmul operands run in bf16
    # (native MXU path, half the HBM bytes).
    rows = jnp.transpose(x, (0, 2, 3, 4, 1)).reshape(B * D0 * H0 * W0, C)
    rows = rows.astype(jnp.bfloat16)
    # Deferred interleave: each stage just multiplies the row count by K
    # (pure reshape, no per-stage transpose / HBM round trip).
    for st in stages[:-1]:
        K = st["stride"][0] * st["stride"][1] * st["stride"][2]
        C_out = st["w"].shape[1]
        out = _decode_stage_mid(rows, st, eps, tn_target, num_cores)
        rows = out.reshape(out.shape[0] * K, C_out)
    last = stages[-1]
    outT = _decode_stage_last(rows, last, tn_target, num_cores)
    strides_list = [st["stride"] for st in stages]
    return _assemble_ncdhw(outT, (B, D0, H0, W0), strides_list,
                           last["w"].shape[1])


# ---------------------------------------------------------------------------
# Pure-JAX reference (per-stage interleave, exact erf GELU) for validation
# ---------------------------------------------------------------------------
def _reference_forward(x, stages, eps=1e-6):
    B, C, D, H, W = x.shape
    rows = jnp.transpose(x, (0, 2, 3, 4, 1)).reshape(B * D * H * W, C)
    rows = rows.astype(jnp.bfloat16)
    spatial = (B, D, H, W)
    n_stages = len(stages)
    for idx, st in enumerate(stages):
        C_in = rows.shape[1]
        w, cb = st["w"], st["cb"]
        s0, s1, s2 = st["stride"]
        C_out = w.shape[1]
        K = s0 * s1 * s2
        w_fold = jnp.transpose(w, (0, 2, 3, 4, 1)).reshape(C_in, K * C_out)
        y = jnp.dot(rows, w_fold.astype(jnp.bfloat16),
                    preferred_element_type=jnp.float32) + jnp.tile(cb, K)[None, :]
        if idx < n_stages - 1:
            yk = y.reshape(-1, K, C_out)
            u = yk.mean(-1, keepdims=True)
            v = jnp.mean((yk - u) ** 2, -1, keepdims=True)
            yk = (yk - u) / jnp.sqrt(v + eps)
            yk = st["ln_w"][None, None, :] * yk + st["ln_b"][None, None, :]
            yk = jax.nn.gelu(yk, approximate=False)
            y = yk.reshape(-1, K * C_out).astype(jnp.bfloat16)
        Bq, Dq, Hq, Wq = spatial
        y = y.reshape(Bq, Dq, Hq, Wq, s0, s1, s2, C_out)
        y = jnp.transpose(y, (0, 1, 4, 2, 5, 3, 6, 7))
        spatial = (Bq, Dq * s0, Hq * s1, Wq * s2)
        rows = y.reshape(-1, C_out)
    Bq, Dq, Hq, Wq = spatial
    y = rows.astype(jnp.float32).reshape(Bq, Dq, Hq, Wq, -1)
    return jnp.transpose(y, (0, 4, 1, 2, 3))


if __name__ == "__main__":
    key = jax.random.PRNGKey(0)
    kx, kp = jax.random.split(key)

    patch_size = (4, 4, 4)
    embed_dim = 32
    out_channels = 4
    B, px, py, pz = 2, 2, 2, 2   # (B, embed_dim, px, py, pz) transformer tokens

    stages = build_patch_decode(kp, patch_size, embed_dim, out_channels)
    x = jax.random.normal(kx, (B, embed_dim, px, py, pz), jnp.float32)

    fwd = jax.jit(lambda v: patch_decode_forward(v, stages))
    y = jax.block_until_ready(fwd(x))

    expected = (B, out_channels,
                px * patch_size[0], py * patch_size[1], pz * patch_size[2])
    assert y.shape == expected, (y.shape, expected)
    assert bool(jnp.all(jnp.isfinite(y)))

    # Validate the fused LN/GELU math and the deferred-permutation layout
    # against a pure-JAX reference (tolerance covers bf16 matmul inputs and
    # the A&S erf / approx-reciprocal in the kernel).
    ref = jax.block_until_ready(jax.jit(lambda v: _reference_forward(v, stages))(x))
    np.testing.assert_allclose(np.asarray(y, np.float32),
                               np.asarray(ref, np.float32),
                               rtol=5e-2, atol=5e-2)
    print("KERNEL_OK")
</pallas_src>

<mosaic_0001>
module attributes {stable_mosaic.version = 11 : i64} {
  func.func @kernel(%arg0: i32, %arg1: memref<16x32xbf16, #tpu.memory_space<vmem>>, %arg2: memref<32x128xbf16, #tpu.memory_space<vmem>>, %arg3: memref<1x128xf32, #tpu.memory_space<vmem>>, %arg4: memref<1x128xf32, #tpu.memory_space<vmem>>, %arg5: memref<1x128xf32, #tpu.memory_space<vmem>>, %arg6: memref<128x8xf32, #tpu.memory_space<vmem>>, %arg7: memref<8x128xf32, #tpu.memory_space<vmem>>, %arg8: memref<16x128xbf16, #tpu.memory_space<vmem>>) attributes {dimension_semantics = [#tpu.dimension_semantics<parallel>], iteration_bounds = array<i64: 1>, scalar_prefetch = 0 : i64, scratch_operands = 0 : i64, tpu.core_type = #tpu.core_type<tc>, window_params = [{transform_indices = @transform_0, window_bounds = array<i64: 16, 32>}, {pipeline_mode = #tpu.pipeline_mode<synchronous>, transform_indices = @transform_1, window_bounds = array<i64: 32, 128>}, {pipeline_mode = #tpu.pipeline_mode<synchronous>, transform_indices = @transform_2, window_bounds = array<i64: 1, 128>}, {pipeline_mode = #tpu.pipeline_mode<synchronous>, transform_indices = @transform_3, window_bounds = array<i64: 1, 128>}, {pipeline_mode = #tpu.pipeline_mode<synchronous>, transform_indices = @transform_4, window_bounds = array<i64: 1, 128>}, {pipeline_mode = #tpu.pipeline_mode<synchronous>, transform_indices = @transform_5, window_bounds = array<i64: 128, 8>}, {pipeline_mode = #tpu.pipeline_mode<synchronous>, transform_indices = @transform_6, window_bounds = array<i64: 8, 128>}, {transform_indices = @transform_7, window_bounds = array<i64: 16, 128>}]} {
    %c0 = arith.constant 0 : index
    %c0_0 = arith.constant 0 : index
    %0 = vector.load %arg1[%c0, %c0_0] : memref<16x32xbf16, #tpu.memory_space<vmem>>, vector<16x32xbf16>
    %c0_1 = arith.constant 0 : index
    %c0_2 = arith.constant 0 : index
    %1 = vector.load %arg2[%c0_1, %c0_2] : memref<32x128xbf16, #tpu.memory_space<vmem>>, vector<32x128xbf16>
    %cst = arith.constant dense<0.000000e+00> : vector<16x128xf32>
    %2 = tpu.matmul %0, %1, %cst {dimension_numbers = #tpu.dot_dimension_numbers<[1], [0], [0], [1], [0, 0, 1, 1], [], []>} : vector<16x32xbf16>, vector<32x128xbf16>, vector<16x128xf32> -> vector<16x128xf32>
    %c0_3 = arith.constant 0 : index
    %c0_4 = arith.constant 0 : index
    %3 = vector.load %arg3[%c0_3, %c0_4] : memref<1x128xf32, #tpu.memory_space<vmem>>, vector<1x128xf32>
    %4 = vector.broadcast %3 : vector<1x128xf32> to vector<16x128xf32>
    %5 = arith.addf %2, %4 : vector<16x128xf32>
    %c0_5 = arith.constant 0 : index
    %c0_6 = arith.constant 0 : index
    %6 = vector.load %arg6[%c0_5, %c0_6] : memref<128x8xf32, #tpu.memory_space<vmem>>, vector<128x8xf32>
    %cst_7 = arith.constant dense<0.000000e+00> : vector<16x8xf32>
    %7 = tpu.matmul %5, %6, %cst_7 {dimension_numbers = #tpu.dot_dimension_numbers<[1], [0], [0], [1], [0, 0, 1, 1], [], []>} : vector<16x128xf32>, vector<128x8xf32>, vector<16x8xf32> -> vector<16x8xf32>
    %c0_8 = arith.constant 0 : index
    %c0_9 = arith.constant 0 : index
    %8 = vector.load %arg7[%c0_8, %c0_9] : memref<8x128xf32, #tpu.memory_space<vmem>>, vector<8x128xf32>
    %cst_10 = arith.constant dense<0.000000e+00> : vector<16x128xf32>
    %9 = tpu.matmul %7, %8, %cst_10 {dimension_numbers = #tpu.dot_dimension_numbers<[1], [0], [0], [1], [0, 0, 1, 1], [], []>} : vector<16x8xf32>, vector<8x128xf32>, vector<16x128xf32> -> vector<16x128xf32>
    %10 = arith.subf %5, %9 : vector<16x128xf32>
    %11 = arith.mulf %10, %10 : vector<16x128xf32>
    %c0_11 = arith.constant 0 : index
    %c0_12 = arith.constant 0 : index
    %12 = vector.load %arg6[%c0_11, %c0_12] : memref<128x8xf32, #tpu.memory_space<vmem>>, vector<128x8xf32>
    %cst_13 = arith.constant dense<0.000000e+00> : vector<16x8xf32>
    %13 = tpu.matmul %11, %12, %cst_13 {dimension_numbers = #tpu.dot_dimension_numbers<[1], [0], [0], [1], [0, 0, 1, 1], [], []>} : vector<16x128xf32>, vector<128x8xf32>, vector<16x8xf32> -> vector<16x8xf32>
    %c0_14 = arith.constant 0 : index
    %c0_15 = arith.constant 0 : index
    %14 = vector.load %arg7[%c0_14, %c0_15] : memref<8x128xf32, #tpu.memory_space<vmem>>, vector<8x128xf32>
    %cst_16 = arith.constant dense<0.000000e+00> : vector<16x128xf32>
    %15 = tpu.matmul %13, %14, %cst_16 {dimension_numbers = #tpu.dot_dimension_numbers<[1], [0], [0], [1], [0, 0, 1, 1], [], []>} : vector<16x8xf32>, vector<8x128xf32>, vector<16x128xf32> -> vector<16x128xf32>
    %cst_17 = arith.constant 9.99999997E-7 : f32
    %16 = vector.broadcast %cst_17 : f32 to vector<16x128xf32>
    %17 = arith.addf %15, %16 : vector<16x128xf32>
    %18 = math.rsqrt %17 : vector<16x128xf32>
    %19 = arith.mulf %10, %18 : vector<16x128xf32>
    %c0_18 = arith.constant 0 : index
    %c0_19 = arith.constant 0 : index
    %20 = vector.load %arg4[%c0_18, %c0_19] : memref<1x128xf32, #tpu.memory_space<vmem>>, vector<1x128xf32>
    %21 = vector.broadcast %20 : vector<1x128xf32> to vector<16x128xf32>
    %22 = arith.mulf %21, %19 : vector<16x128xf32>
    %c0_20 = arith.constant 0 : index
    %c0_21 = arith.constant 0 : index
    %23 = vector.load %arg5[%c0_20, %c0_21] : memref<1x128xf32, #tpu.memory_space<vmem>>, vector<1x128xf32>
    %24 = vector.broadcast %23 : vector<1x128xf32> to vector<16x128xf32>
    %25 = arith.addf %22, %24 : vector<16x128xf32>
    %26 = math.absf %25 : vector<16x128xf32>
    %cst_22 = arith.constant 0.231641889 : f32
    %27 = vector.broadcast %cst_22 : f32 to vector<16x128xf32>
    %28 = arith.mulf %27, %26 : vector<16x128xf32>
    %cst_23 = arith.constant 1.000000e+00 : f32
    %29 = vector.broadcast %cst_23 : f32 to vector<16x128xf32>
    %30 = arith.addf %29, %28 : vector<16x128xf32>
    %31 = tpu.reciprocal %30 {approx = true} : vector<16x128xf32> -> vector<16x128xf32>
    %cst_24 = arith.constant 0.53070271 : f32
    %32 = vector.broadcast %cst_24 : f32 to vector<16x128xf32>
    %33 = arith.mulf %32, %31 : vector<16x128xf32>
    %cst_25 = arith.constant -0.72657603 : f32
    %34 = vector.broadcast %cst_25 : f32 to vector<16x128xf32>
    %35 = arith.addf %33, %34 : vector<16x128xf32>
    %36 = arith.mulf %35, %31 : vector<16x128xf32>
    %cst_26 = arith.constant 0.710706889 : f32
    %37 = vector.broadcast %cst_26 : f32 to vector<16x128xf32>
    %38 = arith.addf %36, %37 : vector<16x128xf32>
    %39 = arith.mulf %38, %31 : vector<16x128xf32>
    %cst_27 = arith.constant -0.142248362 : f32
    %40 = vector.broadcast %cst_27 : f32 to vector<16x128xf32>
    %41 = arith.addf %39, %40 : vector<16x128xf32>
    %42 = arith.mulf %41, %31 : vector<16x128xf32>
    %cst_28 = arith.constant 0.127414793 : f32
    %43 = vector.broadcast %cst_28 : f32 to vector<16x128xf32>
    %44 = arith.addf %42, %43 : vector<16x128xf32>
    %45 = arith.mulf %44, %31 : vector<16x128xf32>
    %cst_29 = arith.constant 0.000000e+00 : f32
    %46 = vector.broadcast %cst_29 : f32 to vector<16x128xf32>
    %47 = arith.maximumf %25, %46 : vector<16x128xf32>
    %48 = arith.mulf %26, %45 : vector<16x128xf32>
    %49 = arith.mulf %25, %25 : vector<16x128xf32>
    %cst_30 = arith.constant -5.000000e-01 : f32
    %50 = vector.broadcast %cst_30 : f32 to vector<16x128xf32>
    %51 = arith.mulf %50, %49 : vector<16x128xf32>
    %52 = math.exp %51 : vector<16x128xf32>
    %53 = arith.mulf %48, %52 : vector<16x128xf32>
    %54 = arith.subf %47, %53 : vector<16x128xf32>
    %55 = arith.truncf %54 : vector<16x128xf32> to vector<16x128xbf16>
    %c0_31 = arith.constant 0 : index
    %c0_32 = arith.constant 0 : index
    %56 = vector.load %arg8[%c0_31, %c0_32] : memref<16x128xbf16, #tpu.memory_space<vmem>>, vector<16x128xbf16>
    tpu.vector_store %arg8[%c0_31, %c0_32], %55 {strides = array<i32>} : memref<16x128xbf16, #tpu.memory_space<vmem>>, vector<16x128xbf16>,
    return
  }
  func.func @transform_0(%arg0: i32) -> (i32, i32) {
    %c0_i32 = arith.constant 0 : i32
    %c0_i32_0 = arith.constant 0 : i32
    return %arg0, %c0_i32 : i32, i32
  }
  func.func @transform_1(%arg0: i32) -> (i32, i32) {
    %c0_i32 = arith.constant 0 : i32
    %c0_i32_0 = arith.constant 0 : i32
    %c0_i32_1 = arith.constant 0 : i32
    return %c0_i32, %c0_i32_0 : i32, i32
  }
  func.func @transform_2(%arg0: i32) -> (i32, i32) {
    %c0_i32 = arith.constant 0 : i32
    %c0_i32_0 = arith.constant 0 : i32
    %c0_i32_1 = arith.constant 0 : i32
    return %c0_i32, %c0_i32_0 : i32, i32
  }
  func.func @transform_3(%arg0: i32) -> (i32, i32) {
    %c0_i32 = arith.constant 0 : i32
    %c0_i32_0 = arith.constant 0 : i32
    %c0_i32_1 = arith.constant 0 : i32
    return %c0_i32, %c0_i32_0 : i32, i32
  }
  func.func @transform_4(%arg0: i32) -> (i32, i32) {
    %c0_i32 = arith.constant 0 : i32
    %c0_i32_0 = arith.constant 0 : i32
    %c0_i32_1 = arith.constant 0 : i32
    return %c0_i32, %c0_i32_0 : i32, i32
  }
  func.func @transform_5(%arg0: i32) -> (i32, i32) {
    %c0_i32 = arith.constant 0 : i32
    %c0_i32_0 = arith.constant 0 : i32
    %c0_i32_1 = arith.constant 0 : i32
    return %c0_i32, %c0_i32_0 : i32, i32
  }
  func.func @transform_6(%arg0: i32) -> (i32, i32) {
    %c0_i32 = arith.constant 0 : i32
    %c0_i32_0 = arith.constant 0 : i32
    %c0_i32_1 = arith.constant 0 : i32
    return %c0_i32, %c0_i32_0 : i32, i32
  }
  func.func @transform_7(%arg0: i32) -> (i32, i32) {
    %c0_i32 = arith.constant 0 : i32
    %c0_i32_0 = arith.constant 0 : i32
    return %arg0, %c0_i32 : i32, i32
  }
}

module attributes {stable_mosaic.version = 11 : i64} {
  func.func @_conv_last_kernel(%arg0: i32, %arg1: memref<128x16xbf16, #tpu.memory_space<vmem>>, %arg2: memref<16x32xbf16, #tpu.memory_space<vmem>>, %arg3: memref<1x32xf32, #tpu.memory_space<vmem>>, %arg4: memref<32x128xf32, #tpu.memory_space<vmem>>) attributes {dimension_semantics = [#tpu.dimension_semantics<parallel>], iteration_bounds = array<i64: 1>, scalar_prefetch = 0 : i64, scratch_operands = 0 : i64, tpu.core_type = #tpu.core_type<tc>, window_params = [{transform_indices = @transform_0, window_bounds = array<i64: 128, 16>}, {pipeline_mode = #tpu.pipeline_mode<synchronous>, transform_indices = @transform_1, window_bounds = array<i64: 16, 32>}, {pipeline_mode = #tpu.pipeline_mode<synchronous>, transform_indices = @transform_2, window_bounds = array<i64: 1, 32>}, {transform_indices = @transform_3, window_bounds = array<i64: 32, 128>}]} {
    %c0 = arith.constant 0 : index
    %c0_0 = arith.constant 0 : index
    %0 = vector.load %arg1[%c0, %c0_0] : memref<128x16xbf16, #tpu.memory_space<vmem>>, vector<128x16xbf16>
    %c0_1 = arith.constant 0 : index
    %c0_2 = arith.constant 0 : index
    %1 = vector.load %arg2[%c0_1, %c0_2] : memref<16x32xbf16, #tpu.memory_space<vmem>>, vector<16x32xbf16>
    %cst = arith.constant dense<0.000000e+00> : vector<128x32xf32>
    %2 = tpu.matmul %0, %1, %cst {dimension_numbers = #tpu.dot_dimension_numbers<[1], [0], [0], [1], [0, 0, 1, 1], [], []>} : vector<128x16xbf16>, vector<16x32xbf16>, vector<128x32xf32> -> vector<128x32xf32>
    %c0_3 = arith.constant 0 : index
    %c0_4 = arith.constant 0 : index
    %3 = vector.load %arg3[%c0_3, %c0_4] : memref<1x32xf32, #tpu.memory_space<vmem>>, vector<1x32xf32>
    %4 = vector.broadcast %3 : vector<1x32xf32> to vector<128x32xf32>
    %5 = arith.addf %2, %4 : vector<128x32xf32>
    %6 = tpu.transpose %5, [1, 0] : vector<128x32xf32> -> vector<32x128xf32>
    %c0_5 = arith.constant 0 : index
    %c0_6 = arith.constant 0 : index
    %7 = vector.load %arg4[%c0_5, %c0_6] : memref<32x128xf32, #tpu.memory_space<vmem>>, vector<32x128xf32>
    tpu.vector_store %arg4[%c0_5, %c0_6], %6 {strides = array<i32>} : memref<32x128xf32, #tpu.memory_space<vmem>>, vector<32x128xf32>,
    return
  }
  func.func @transform_0(%arg0: i32) -> (i32, i32) {
    %c0_i32 = arith.constant 0 : i32
    %c0_i32_0 = arith.constant 0 : i32
    return %arg0, %c0_i32 : i32, i32
  }
  func.func @transform_1(%arg0: i32) -> (i32, i32) {
    %c0_i32 = arith.constant 0 : i32
    %c0_i32_0 = arith.constant 0 : i32
    %c0_i32_1 = arith.constant 0 : i32
    return %c0_i32, %c0_i32_0 : i32, i32
  }
  func.func @transform_2(%arg0: i32) -> (i32, i32) {
    %c0_i32 = arith.constant 0 : i32
    %c0_i32_0 = arith.constant 0 : i32
    %c0_i32_1 = arith.constant 0 : i32
    return %c0_i32, %c0_i32_0 : i32, i32
  }
  func.func @transform_3(%arg0: i32) -> (i32, i32) {
    %c0_i32 = arith.constant 0 : i32
    %c0_i32_0 = arith.constant 0 : i32
    return %c0_i32, %arg0 : i32, i32
  }
}

</mosaic_0001>

<llo_original>
// kernel: tile.14
$region0: #{tile.14}
  #allocation0 [shape = 's32[1]{0}', space=sflag, size = 0x4, scoped, tag = 'scoped memory for tile.14']
  %s0 = inlined_call_operand.vmem [shape: f32[16], index: 0, kind: input, shape index: {}]
  %s1 = inlined_call_operand.vmem [shape: f32[8,16], index: 1, kind: output, shape index: {}]
  // Predicated region
  $region2: #{tile.14} parent=0 // pred_check
    _
  $region3: #{tile.14} parent=0 // pred_check_branch
    %3 = sbr.rel (0) target = $region5
  $region4: #{tile.14} parent=0 // pred_region
    _
  $region5: #{tile.14} parent=0 // pred_fallthru
    _
  %v4 = vld [vmem:[%s0] ss:$0 sm:$0xff]
  %5 = vst [vmem:[%s1] sm:$0xff] %v4

// kernel: tile.10
$region0: #{tile.10}
  #allocation0 [shape = 's32[1]{0}', space=sflag, size = 0x4, scoped, tag = 'scoped memory for tile.10']
  %s0 = inlined_call_operand.<no memory space> [shape: f32[], index: 0, kind: input, shape index: {}]
  %s1 = inlined_call_operand.vmem [shape: f32[1,128], index: 1, kind: output, shape index: {}]
  %v2 = vstv %s0
  %3 = vst [vmem:[%s1] sm:$0x1] %v2

// kernel: tile.15
$region0: #{tile.15}
  %s0 = inlined_call_operand.vmem [shape: f32[8,16], index: 0, kind: input, shape index: {}]
  %s1 = inlined_call_operand.vmem [shape: f32[1,128], index: 1, kind: output, shape index: {}]
  $region1: #{tile.15} parent=0
    #allocation0 [shape = 'u8[4096]{0}', space=vmem, size = 0x1000, scoped, tag = 'scoped mem for output reshape']
    %v2 = vld [vmem:[%s0] sm:$0x1]
    %vm3 = vcmask 130048
    %4 = vst.msk [vmem:[#allocation0] sm:$0x1] %vm3, %v2
    %s5 = scalar_lea.vmem %s0, 7
    %v6 = vld [vmem:[%s5] sm:$0x1]
    %7 = vrot.lane.b32.xlu0 %v6, 112
    %v8 = vpop.permute.xlu0 %7
    %vm9 = vcmask 1048448
    %10 = vst.msk [vmem:[#allocation0] sm:$0x1] %vm9, %v8
    %s11 = scalar_lea.vmem %s0, 6
    %v12 = vld [vmem:[%s11] sm:$0x1]
    %13 = vrot.lane.b32.xlu0 %v12, 96
    %v14 = vpop.permute.xlu0 %13
    %vm15 = vcmask 917248
    %16 = vst.msk [vmem:[#allocation0] sm:$0x1] %vm15, %v14
    %s17 = scalar_lea.vmem %s0, 5
    %v18 = vld [vmem:[%s17] sm:$0x1]
    %19 = vrot.lane.b32.xlu0 %v18, 80
    %v20 = vpop.permute.xlu0 %19
    %vm21 = vcmask 786048
    %22 = vst.msk [vmem:[#allocation0] sm:$0x1] %vm21, %v20
    %s23 = scalar_lea.vmem %s0, 4
    %v24 = vld [vmem:[%s23] sm:$0x1]
    %25 = vrot.lane.b32.xlu0 %v24, 64
    %v26 = vpop.permute.xlu0 %25
    %vm27 = vcmask 654848
    %28 = vst.msk [vmem:[#allocation0] sm:$0x1] %vm27, %v26
    %s29 = scalar_lea.vmem %s0, 3
    %v30 = vld [vmem:[%s29] sm:$0x1]
    %31 = vrot.lane.b32.xlu0 %v30, 48
    %v32 = vpop.permute.xlu0 %31
    %vm33 = vcmask 523648
    %34 = vst.msk [vmem:[#allocation0] sm:$0x1] %vm33, %v32
    %s35 = scalar_lea.vmem %s0, 2
    %v36 = vld [vmem:[%s35] sm:$0x1]
    %37 = vrot.lane.b32.xlu0 %v36, 32
    %v38 = vpop.permute.xlu0 %37
    %vm39 = vcmask 392448
    %40 = vst.msk [vmem:[#allocation0] sm:$0x1] %vm39, %v38
    %s41 = scalar_lea.vmem %s0, 1
    %v42 = vld [vmem:[%s41] sm:$0x1]
    %43 = vrot.lane.b32.xlu0 %v42, 16
    %v44 = vpop.permute.xlu0 %43
    %vm45 = vcmask 261248
    %46 = vst.msk [vmem:[#allocation0] sm:$0x1] %vm45, %v44
    %s48 = sshllo.u32 0, 1
    %v50 = vld [vmem:[#allocation0] sm:%s48]
    %s51 = sshllo.u32 0, 1
    %52 = vst [vmem:[%s1] sm:%s51] %v50

// kernel: tile.18
$region0: #{tile.18}
  #allocation0 [shape = 's32[1]{0}', space=sflag, size = 0x4, scoped, tag = 'scoped memory for tile.18']
  %s0 = inlined_call_operand.vmem [shape: f32[4], index: 0, kind: input, shape index: {}]
  %s1 = inlined_call_operand.vmem [shape: f32[8,4], index: 1, kind: output, shape index: {}]
  // Predicated region
  $region2: #{tile.18} parent=0 // pred_check
    _
  $region3: #{tile.18} parent=0 // pred_check_branch
    %3 = sbr.rel (0) target = $region5
  $region4: #{tile.18} parent=0 // pred_region
    _
  $region5: #{tile.18} parent=0 // pred_fallthru
    _
  %v4 = vld [vmem:[%s0] ss:$0 sm:$0xff]
  %5 = vst [vmem:[%s1] sm:$0xff] %v4

// kernel: tile.19
$region0: #{tile.19}
  %s0 = inlined_call_operand.vmem [shape: f32[8,4], index: 0, kind: input, shape index: {}]
  %s1 = inlined_call_operand.vmem [shape: f32[1,32], index: 1, kind: output, shape index: {}]
  $region1: #{tile.19} parent=0
    #allocation0 [shape = 'u8[4096]{0}', space=vmem, size = 0x1000, scoped, tag = 'scoped mem for output reshape']
    %v2 = vld [vmem:[%s0] sm:$0x1]
    %vm3 = vcmask 31744
    %4 = vst.msk [vmem:[#allocation0] sm:$0x1] %vm3, %v2
    %s5 = scalar_lea.vmem %s0, 7
    %v6 = vld [vmem:[%s5] sm:$0x1]
    %7 = vrot.lane.b32.xlu0 %v6, 28
    %v8 = vpop.permute.xlu0 %7
    %vm9 = vcmask 261344
    %10 = vst.msk [vmem:[#allocation0] sm:$0x1] %vm9, %v8
    %s11 = scalar_lea.vmem %s0, 6
    %v12 = vld [vmem:[%s11] sm:$0x1]
    %13 = vrot.lane.b32.xlu0 %v12, 24
    %v14 = vpop.permute.xlu0 %13
    %vm15 = vcmask 228544
    %16 = vst.msk [vmem:[#allocation0] sm:$0x1] %vm15, %v14
    %s17 = scalar_lea.vmem %s0, 5
    %v18 = vld [vmem:[%s17] sm:$0x1]
    %19 = vrot.lane.b32.xlu0 %v18, 20
    %v20 = vpop.permute.xlu0 %19
    %vm21 = vcmask 195744
    %22 = vst.msk [vmem:[#allocation0] sm:$0x1] %vm21, %v20
    %s23 = scalar_lea.vmem %s0, 4
    %v24 = vld [vmem:[%s23] sm:$0x1]
    %25 = vrot.lane.b32.xlu0 %v24, 16
    %v26 = vpop.permute.xlu0 %25
    %vm27 = vcmask 162944
    %28 = vst.msk [vmem:[#allocation0] sm:$0x1] %vm27, %v26
    %s29 = scalar_lea.vmem %s0, 3
    %v30 = vld [vmem:[%s29] sm:$0x1]
    %31 = vrot.lane.b32.xlu0 %v30, 12
    %v32 = vpop.permute.xlu0 %31
    %vm33 = vcmask 130144
    %34 = vst.msk [vmem:[#allocation0] sm:$0x1] %vm33, %v32
    %s35 = scalar_lea.vmem %s0, 2
    %v36 = vld [vmem:[%s35] sm:$0x1]
    %37 = vrot.lane.b32.xlu0 %v36, 8
    %v38 = vpop.permute.xlu0 %37
    %vm39 = vcmask 97344
    %40 = vst.msk [vmem:[#allocation0] sm:$0x1] %vm39, %v38
    %s41 = scalar_lea.vmem %s0, 1
    %v42 = vld [vmem:[%s41] sm:$0x1]
    %43 = vrot.lane.b32.xlu0 %v42, 4
    %v44 = vpop.permute.xlu0 %43
    %vm45 = vcmask 64544
    %46 = vst.msk [vmem:[#allocation0] sm:$0x1] %vm45, %v44
    %s48 = sshllo.u32 0, 1
    %v50 = vld [vmem:[#allocation0] sm:%s48]
    %s51 = sshllo.u32 0, 1
    %52 = vst [vmem:[%s1] sm:%s51] %v50

// kernel: _lambda_.3
$region0: #{_lambda_.3}
  #allocation0 [shape = 'u32[]', space=smem, size = 0x4, offset = 0x4, fixed_abs, tag = 'smem constant byte address 0x4 - core index']
  #allocation1 [shape = 'u32[144,128]{1,0:T(1,128)}', space=vmem, size = 0x12000, scoped, tag = 'internal scratch']
  %s0 = inlined_call_operand.vmem [shape: bf16[128,16], index: 0, kind: input, shape index: {}]
  %s1 = inlined_call_operand.vmem [shape: bf16[16,32], index: 1, kind: input, shape index: {}]
  %s2 = inlined_call_operand.vmem [shape: f32[1,32], index: 2, kind: input, shape index: {}]
  %s3 = inlined_call_operand.vmem [shape: f32[32,128], index: 3, kind: output, shape index: {}]
  %s4 = sld [smem:[#allocation0]]
  $region22: #{_lambda_.3} parent=0
    _
  %s6 = ssub.s32 1, %s4
  %s7 = scalar_select 0, %s6, %s4
  // Predicated region
  $region2: #{_lambda_.3} parent=0 // pred_check
    _
  $region3: #{_lambda_.3} parent=0 // pred_check_branch
    %9 = sbr.rel (0) target = $region5
  $region4: #{_lambda_.3} parent=0 // pred_region
    _
  $region5: #{_lambda_.3} parent=0 // pred_fallthru
    _
  // Predicated region
  $region6: #{_lambda_.3} parent=0 // pred_check
    _
  $region7: #{_lambda_.3} parent=0 // pred_check_branch
    %11 = sbr.rel (0) target = $region9
  $region8: #{_lambda_.3} parent=0 // pred_region
    _
  $region9: #{_lambda_.3} parent=0 // pred_fallthru
    _
  // Predicated region
  $region10: #{_lambda_.3} parent=0 // pred_check
    _
  $region11: #{_lambda_.3} parent=0 // pred_check_branch
    %13 = sbr.rel (0) target = $region13
  $region12: #{_lambda_.3} parent=0 // pred_region
    _
  $region13: #{_lambda_.3} parent=0 // pred_fallthru
    _
  %v15 = vld [vmem:[%s0] sm:$0xf]
  %v16 = vld [vmem:[%s0 + $0x4] sm:$0xf]
  %v17 = vld [vmem:[%s0 + $0x8] sm:$0xf]
  %v18 = vld [vmem:[%s0 + $0xc] sm:$0xf]
  %v19 = vld [vmem:[%s0 + $0x10] sm:$0xf]
  %v20 = vld [vmem:[%s0 + $0x14] sm:$0xf]
  %v21 = vld [vmem:[%s0 + $0x18] sm:$0xf]
  %v22 = vld [vmem:[%s0 + $0x1c] sm:$0xf]
  %v23 = vld [vmem:[%s0 + $0x20] sm:$0xf]
  %v24 = vld [vmem:[%s0 + $0x24] sm:$0xf]
  %v25 = vld [vmem:[%s0 + $0x28] sm:$0xf]
  %v26 = vld [vmem:[%s0 + $0x2c] sm:$0xf]
  %v27 = vld [vmem:[%s0 + $0x30] sm:$0xf]
  %v28 = vld [vmem:[%s0 + $0x34] sm:$0xf]
  %v29 = vld [vmem:[%s0 + $0x38] sm:$0xf]
  %v30 = vld [vmem:[%s0 + $0x3c] sm:$0xf]
  %v31 = vld [vmem:[%s1] sm:$0xf]
  %v32 = vld [vmem:[%s1 + $0x4] sm:$0xf]
  %v33 = vld [vmem:[%s2] sm:$0x1]
  %v35 = vlaneseq
  %v36 = vshrl.u32 %v35, 7
  %v37 = vsub.s32 0, %v36
  %v38 = vrot.slane %v33, %v37
  %v56 = vunpack.c.l.b16 %v15
  %v57 = vunpack.c.l.b16 %v16
  %v58 = vunpack.c.l.b16 %v17
  %v59 = vunpack.c.l.b16 %v18
  %v60 = vunpack.c.l.b16 %v19
  %v61 = vunpack.c.l.b16 %v20
  %v62 = vunpack.c.l.b16 %v21
  %v63 = vunpack.c.l.b16 %v22
  %v64 = vunpack.c.l.b16 %v23
  %v65 = vunpack.c.l.b16 %v24
  %v66 = vunpack.c.l.b16 %v25
  %v67 = vunpack.c.l.b16 %v26
  %v68 = vunpack.c.l.b16 %v27
  %v69 = vunpack.c.l.b16 %v28
  %v70 = vunpack.c.l.b16 %v29
  %v71 = vunpack.c.l.b16 %v30
  %v72 = vpack.c.b16 %v57, %v56
  %v73 = vpack.c.b16 %v59, %v58
  %v74 = vpack.c.b16 %v61, %v60
  %v75 = vpack.c.b16 %v63, %v62
  %v76 = vpack.c.b16 %v65, %v64
  %v77 = vpack.c.b16 %v67, %v66
  %v78 = vpack.c.b16 %v69, %v68
  %v79 = vpack.c.b16 %v71, %v70
  %v82 = vunpack.c.l.b16 %v31
  %v83 = vunpack.c.l.b16 %v32
  %v84 = vpack.c.b16 %v83, %v82
  %vm86 = vcmask 130048
  %v88 = vsel %vm86, %v72, 0
  %v91 = vsel %vm86, %v73, 0
  %v94 = vsel %vm86, %v74, 0
  %v97 = vsel %vm86, %v75, 0
  %v100 = vsel %vm86, %v76, 0
  %v103 = vsel %vm86, %v77, 0
  %v106 = vsel %vm86, %v78, 0
  %v109 = vsel %vm86, %v79, 0
  %111 = vmatprep.subr.bf16.mxu0 0
  %112 = vmatpush1.bf16.msra.mxu0 %v84
  %113 = vmatprep.subr.bf16.mxu0 0
  %114 = vmatpush1.bf16.msra.mxu0 0
  %115 = vmatprep.subr.bf16.mxu0 0
  %116 = vmatpush1.bf16.msra.mxu0 0
  %117 = vmatprep.subr.bf16.mxu0 0
  %118 = vmatpush1.bf16.msra.mxu0 0
  %119 = vmatprep.subr.bf16.mxu0 0
  %120 = vmatpush1.bf16.msra.mxu0 0
  %121 = vmatprep.subr.bf16.mxu0 0
  %122 = vmatpush1.bf16.msra.mxu0 0
  %123 = vmatprep.subr.bf16.mxu0 0
  %124 = vmatpush1.bf16.msra.mxu0 0
  %125 = vmatprep.subr.bf16.mxu0 0
  %126 = vmatpush1.bf16.msra.mxu0 0
  %127 = vmatprep.subr.bf16.mxu0 0
  %128 = vmatpush1.bf16.msra.mxu0 0
  %129 = vmatprep.subr.bf16.mxu0 0
  %130 = vmatpush1.bf16.msra.mxu0 0
  %131 = vmatprep.subr.bf16.mxu0 0
  %132 = vmatpush1.bf16.msra.mxu0 0
  %133 = vmatprep.subr.bf16.mxu0 0
  %134 = vmatpush1.bf16.msra.mxu0 0
  %135 = vmatprep.subr.bf16.mxu0 0
  %136 = vmatpush1.bf16.msra.mxu0 0
  %137 = vmatprep.subr.bf16.mxu0 0
  %138 = vmatpush1.bf16.msra.mxu0 0
  %139 = vmatprep.subr.bf16.mxu0 0
  %140 = vmatpush1.bf16.msra.mxu0 0
  %141 = vmatprep.subr.bf16.mxu0 0
  %142 = vmatpush1.bf16.msra.mxu0 0
  %143 = vmatprep.mubr.bf16.mxu0 0
  %144 = vmatmul.mubr.bf16.gmra.mrb[0].mxu0 %v88
  %v145 = vpop.f32.mrb[0].mxu0
  %v146 = vadd.f32 %v38, %v145
  %v147 = vpop.f32.mrb[0].mxu0
  %v148 = vpop.f32.mrb[0].mxu0
  %v149 = vadd.f32 %v38, %v148
  %v150 = vpop.f32.mrb[0].mxu0
  %151 = vmatprep.mubr.bf16.mxu0 0
  %152 = vmatmul.mubr.bf16.gmra.mrb[0].mxu0 %v91
  %v153 = vpop.f32.mrb[0].mxu0
  %v154 = vadd.f32 %v38, %v153
  %v155 = vpop.f32.mrb[0].mxu0
  %v156 = vpop.f32.mrb[0].mxu0
  %v157 = vadd.f32 %v38, %v156
  %v158 = vpop.f32.mrb[0].mxu0
  %159 = vmatprep.mubr.bf16.mxu0 0
  %160 = vmatmul.mubr.bf16.gmra.mrb[0].mxu0 %v94
  %v161 = vpop.f32.mrb[0].mxu0
  %v162 = vadd.f32 %v38, %v161
  %v163 = vpop.f32.mrb[0].mxu0
  %v164 = vpop.f32.mrb[0].mxu0
  %v165 = vadd.f32 %v38, %v164
  %v166 = vpop.f32.mrb[0].mxu0
  %167 = vmatprep.mubr.bf16.mxu0 0
  %168 = vmatmul.mubr.bf16.gmra.mrb[0].mxu0 %v97
  %v169 = vpop.f32.mrb[0].mxu0
  %v170 = vadd.f32 %v38, %v169
  %v171 = vpop.f32.mrb[0].mxu0
  %v172 = vpop.f32.mrb[0].mxu0
  %v173 = vadd.f32 %v38, %v172
  %v174 = vpop.f32.mrb[0].mxu0
  %175 = vmatprep.mubr.bf16.mxu0 0
  %176 = vmatmul.mubr.bf16.gmra.mrb[0].mxu0 %v100
  %v177 = vpop.f32.mrb[0].mxu0
  %v178 = vadd.f32 %v38, %v177
  %v179 = vpop.f32.mrb[0].mxu0
  %v180 = vpop.f32.mrb[0].mxu0
  %v181 = vadd.f32 %v38, %v180
  %v182 = vpop.f32.mrb[0].mxu0
  %183 = vmatprep.mubr.bf16.mxu0 0
  %184 = vmatmul.mubr.bf16.gmra.mrb[0].mxu0 %v103
  %v185 = vpop.f32.mrb[0].mxu0
  %v186 = vadd.f32 %v38, %v185
  %v187 = vpop.f32.mrb[0].mxu0
  %v188 = vpop.f32.mrb[0].mxu0
  %v189 = vadd.f32 %v38, %v188
  %v190 = vpop.f32.mrb[0].mxu0
  %191 = vmatprep.mubr.bf16.mxu0 0
  %192 = vmatmul.mubr.bf16.gmra.mrb[0].mxu0 %v106
  %v193 = vpop.f32.mrb[0].mxu0
  %v194 = vadd.f32 %v38, %v193
  %v195 = vpop.f32.mrb[0].mxu0
  %v196 = vpop.f32.mrb[0].mxu0
  %v197 = vadd.f32 %v38, %v196
  %v198 = vpop.f32.mrb[0].mxu0
  %199 = vmatprep.mubr.bf16.mxu0 0
  %200 = vmatmul.mubr.bf16.gmra.mrb[0].mxu0 %v109
  %v201 = vpop.f32.mrb[0].mxu0
  %v202 = vadd.f32 %v38, %v201
  %v203 = vpop.f32.mrb[0].mxu0
  %v204 = vpop.f32.mrb[0].mxu0
  %v205 = vadd.f32 %v38, %v204
  %v206 = vpop.f32.mrb[0].mxu0
  %207 = vdwg.mxu0
  %208 = vxpose.xlu0.b32.start [1/16] %v146, 128
  %209 = vxpose.xlu0.b32.cont [2/16] %v149, 128
  %210 = vxpose.xlu0.b32.cont [3/16] %v154, 128
  %211 = vxpose.xlu0.b32.cont [4/16] %v157, 128
  %212 = vxpose.xlu0.b32.cont [5/16] %v162, 128
  %213 = vxpose.xlu0.b32.cont [6/16] %v165, 128
  %214 = vxpose.xlu0.b32.cont [7/16] %v170, 128
  %215 = vxpose.xlu0.b32.cont [8/16] %v173, 128
  %216 = vxpose.xlu0.b32.cont [9/16] %v178, 128
  %217 = vxpose.xlu0.b32.cont [10/16] %v181, 128
  %218 = vxpose.xlu0.b32.cont [11/16] %v186, 128
  %219 = vxpose.xlu0.b32.cont [12/16] %v189, 128
  %220 = vxpose.xlu0.b32.cont [13/16] %v194, 128
  %221 = vxpose.xlu0.b32.cont [14/16] %v197, 128
  %222 = vxpose.xlu0.b32.cont [15/16] %v202, 128
  %223 = vxpose.xlu0.b32.end [16/16] %v205, 128
  %v224 = vpop.trf.xlu0
  %v225 = vpop.trf.xlu0
  %v226 = vpop.trf.xlu0
  %v227 = vpop.trf.xlu0
  %v228 = vpop.trf.xlu0
  %v229 = vpop.trf.xlu0
  %v230 = vpop.trf.xlu0
  %v231 = vpop.trf.xlu0
  %v232 = vpop.trf.xlu0
  %v233 = vpop.trf.xlu0
  %v234 = vpop.trf.xlu0
  %v235 = vpop.trf.xlu0
  %v236 = vpop.trf.xlu0
  %v237 = vpop.trf.xlu0
  %v238 = vpop.trf.xlu0
  %v239 = vpop.trf.xlu0
  %240 = vst [vmem:[%s3] sm:$0xff] %v224
  %241 = vst [vmem:[%s3 + $0x8] sm:$0xff] %v225
  %242 = vst [vmem:[%s3 + $0x10] sm:$0xff] %v226
  %243 = vst [vmem:[%s3 + $0x18] sm:$0xff] %v227
  // Predicated region
  $region14: #{_lambda_.3} parent=0 // pred_check
    _
  $region15: #{_lambda_.3} parent=0 // pred_check_branch
    %245 = sbr.rel (0) target = $region17
  $region16: #{_lambda_.3} parent=0 // pred_region
    _
  $region17: #{_lambda_.3} parent=0 // pred_fallthru
    _
  // Predicated region
  $region18: #{_lambda_.3} parent=0 // pred_check
    _
  $region19: #{_lambda_.3} parent=0 // pred_check_branch
    %247 = sbr.rel (0) target = $region21
  $region20: #{_lambda_.3} parent=0 // pred_region
    _
  $region21: #{_lambda_.3} parent=0 // pred_fallthru
    _

// kernel: _lambda_.2
$region0: #{_lambda_.2}
  #allocation0 [shape = 'u32[]', space=smem, size = 0x4, offset = 0x4, fixed_abs, tag = 'smem constant byte address 0x4 - core index']
  #allocation1 [shape = 'u32[144,128]{1,0:T(1,128)}', space=vmem, size = 0x12000, scoped, tag = 'internal scratch']
  %s0 = inlined_call_operand.vmem [shape: bf16[16,32], index: 0, kind: input, shape index: {}]
  %s1 = inlined_call_operand.vmem [shape: bf16[32,128], index: 1, kind: input, shape index: {}]
  %s2 = inlined_call_operand.vmem [shape: f32[1,128], index: 2, kind: input, shape index: {}]
  %s3 = inlined_call_operand.vmem [shape: f32[1,128], index: 3, kind: input, shape index: {}]
  %s4 = inlined_call_operand.vmem [shape: f32[1,128], index: 4, kind: input, shape index: {}]
  %s5 = inlined_call_operand.hbm [shape: f32[128,8], index: 5, kind: input, shape index: {}]
  %s6 = inlined_call_operand.vmem [shape: f32[8,128], index: 6, kind: input, shape index: {}]
  %s7 = inlined_call_operand.vmem [shape: bf16[16,128], index: 7, kind: output, shape index: {}]
  %s8 = sld [smem:[#allocation0]]
  $region42: #{_lambda_.2} parent=0
    _
  %s10 = ssub.s32 1, %s8
  %s11 = scalar_select 0, %s10, %s8
  $region1: #{_lambda_.2} parent=0
    #allocation2 [shape = 'u8[65536]{0}', space=vmem, size = 0x10000, scoped, tag = 'input window, operand 5, single buffered']
    #allocation3 [shape = 's32[1]{0}', space=sflag, size = 0x4, scoped, tag = 'scoped memory for _lambda_.2']
    %12 = vsyncpa [#allocation3], 0
    // Predicated region
    $region2: #{_lambda_.2} parent=1 // pred_check
      _
    $region3: #{_lambda_.2} parent=1 // pred_check_branch
      %14 = sbr.rel (0) target = $region5
    $region4: #{_lambda_.2} parent=1 // pred_region
      _
    $region5: #{_lambda_.2} parent=1 // pred_fallthru
      _
    // Predicated region
    $region6: #{_lambda_.2} parent=1 // pred_check
      _
    $region7: #{_lambda_.2} parent=1 // pred_check_branch
      %16 = sbr.rel (0) target = $region9
    $region8: #{_lambda_.2} parent=1 // pred_region
      _
    $region9: #{_lambda_.2} parent=1 // pred_fallthru
      _
    // Predicated region
    $region10: #{_lambda_.2} parent=1 // pred_check
      _
    $region11: #{_lambda_.2} parent=1 // pred_check_branch
      %18 = sbr.rel (0) target = $region13
    $region12: #{_lambda_.2} parent=1 // pred_region
      _
    $region13: #{_lambda_.2} parent=1 // pred_fallthru
      _
    // Predicated region
    $region14: #{_lambda_.2} parent=1 // pred_check
      _
    $region15: #{_lambda_.2} parent=1 // pred_check_branch
      %20 = sbr.rel (0) target = $region17
    $region16: #{_lambda_.2} parent=1 // pred_region
      _
    $region17: #{_lambda_.2} parent=1 // pred_fallthru
      _
    // Predicated region
    $region18: #{_lambda_.2} parent=1 // pred_check
      _
    $region19: #{_lambda_.2} parent=1 // pred_check_branch
      %22 = sbr.rel (0) target = $region21
    $region20: #{_lambda_.2} parent=1 // pred_region
      _
    $region21: #{_lambda_.2} parent=1 // pred_fallthru
      _
    // Predicated region
    $region22: #{_lambda_.2} parent=1 // pred_check
      _
    $region23: #{_lambda_.2} parent=1 // pred_check_branch
      %24 = sbr.rel (0) target = $region25
    $region24: #{_lambda_.2} parent=1 // pred_region
      %s26 = ssub.s32 2048, 2048
      %27 = vsyncadd [#allocation3], %s26
      %s28 = sshll.u32 [#allocation2], 4
      %s29 = int_to_ptr.vmem [resolvable:$true] %s28
      %34 = dma.hbm_to_vmem [thread:$0]  %s5, 2048, %s29, [#allocation3], 128, 128, 8
    $region25: #{_lambda_.2} parent=1 // pred_fallthru
      _
    // Predicated region
    $region26: #{_lambda_.2} parent=1 // pred_check
      _
    $region27: #{_lambda_.2} parent=1 // pred_check_branch
      %36 = sbr.rel (0) target = $region29
    $region28: #{_lambda_.2} parent=1 // pred_region
      _
    $region29: #{_lambda_.2} parent=1 // pred_fallthru
      _
    // Predicated region
    $region30: #{_lambda_.2} parent=1 // pred_check
      _
    $region31: #{_lambda_.2} parent=1 // pred_check_branch
      %38 = sbr.rel (0) target = $region33
    $region32: #{_lambda_.2} parent=1 // pred_region
      %39 = dma.done [#allocation3], 2048
    $region33: #{_lambda_.2} parent=1 // pred_fallthru
      _
    %v41 = vld [vmem:[%s0] sm:$0xf]
    %v42 = vld [vmem:[%s0 + $0x4] sm:$0xf]
    %v43 = vld [vmem:[%s1] sm:$0xf]
    %v44 = vld [vmem:[%s1 + $0x4] sm:$0xf]
    %v45 = vld [vmem:[%s1 + $0x8] sm:$0xf]
    %v46 = vld [vmem:[%s1 + $0xc] sm:$0xf]
    %v47 = vld [vmem:[%s2] sm:$0x1]
    %v49 = vlaneseq
    %v50 = vshrl.u32 %v49, 7
    %v51 = vsub.s32 0, %v50
    %v52 = vrot.slane %v47, %v51
    %v56 = vunpack.c.l.b16 %v41
    %v57 = vunpack.c.l.b16 %v42
    %v58 = vpack.c.b16 %v57, %v56
    %v63 = vunpack.c.l.b16 %v43
    %v64 = vunpack.c.l.b16 %v44
    %v65 = vunpack.c.l.b16 %v45
    %v66 = vunpack.c.l.b16 %v46
    %v67 = vpack.c.b16 %v64, %v63
    %v68 = vpack.c.b16 %v66, %v65
    %vm71 = vcmask 261120
    %v73 = vsel %vm71, %v58, 0
    %75 = vmatprep.subr.bf16.mxu0 0
    %76 = vmatpush1.bf16.msra.mxu0 %v67
    %77 = vmatprep.subr.bf16.mxu0 0
    %78 = vmatpush1.bf16.msra.mxu0 %v68
    %79 = vmatprep.subr.bf16.mxu0 0
    %80 = vmatpush1.bf16.msra.mxu0 0
    %81 = vmatprep.subr.bf16.mxu0 0
    %82 = vmatpush1.bf16.msra.mxu0 0
    %83 = vmatprep.subr.bf16.mxu0 0
    %84 = vmatpush1.bf16.msra.mxu0 0
    %85 = vmatprep.subr.bf16.mxu0 0
    %86 = vmatpush1.bf16.msra.mxu0 0
    %87 = vmatprep.subr.bf16.mxu0 0
    %88 = vmatpush1.bf16.msra.mxu0 0
    %89 = vmatprep.subr.bf16.mxu0 0
    %90 = vmatpush1.bf16.msra.mxu0 0
    %91 = vmatprep.subr.bf16.mxu0 0
    %92 = vmatpush1.bf16.msra.mxu0 0
    %93 = vmatprep.subr.bf16.mxu0 0
    %94 = vmatpush1.bf16.msra.mxu0 0
    %95 = vmatprep.subr.bf16.mxu0 0
    %96 = vmatpush1.bf16.msra.mxu0 0
    %97 = vmatprep.subr.bf16.mxu0 0
    %98 = vmatpush1.bf16.msra.mxu0 0
    %99 = vmatprep.subr.bf16.mxu0 0
    %100 = vmatpush1.bf16.msra.mxu0 0
    %101 = vmatprep.subr.bf16.mxu0 0
    %102 = vmatpush1.bf16.msra.mxu0 0
    %103 = vmatprep.subr.bf16.mxu0 0
    %104 = vmatpush1.bf16.msra.mxu0 0
    %105 = vmatprep.subr.bf16.mxu0 0
    %106 = vmatpush1.bf16.msra.mxu0 0
    %107 = vmatprep.mubr.bf16.mxu0 0
    %108 = vmatmul.mubr.bf16.gmra.mrb[0].mxu0 %v73
    %v109 = vpop.f32.mrb[0].mxu0
    %v110 = vadd.f32 %v52, %v109
    %v111 = vpop.f32.mrb[0].mxu0
    %v112 = vpop.f32.mrb[0].mxu0
    %v113 = vadd.f32 %v52, %v112
    %v114 = vpop.f32.mrb[0].mxu0
    %115 = vdwg.mxu0
    %v116 = vld [vmem:[#allocation2] sm:$0xff]
    %v117 = vld [vmem:[#allocation2 + $0x8] sm:$0xff]
    %v118 = vld [vmem:[#allocation2 + $0x10] sm:$0xff]
    %v119 = vld [vmem:[#allocation2 + $0x18] sm:$0xff]
    %v120 = vld [vmem:[#allocation2 + $0x20] sm:$0xff]
    %v121 = vld [vmem:[#allocation2 + $0x28] sm:$0xff]
    %v122 = vld [vmem:[#allocation2 + $0x30] sm:$0xff]
    %v123 = vld [vmem:[#allocation2 + $0x38] sm:$0xff]
    %v124 = vld [vmem:[#allocation2 + $0x40] sm:$0xff]
    %v125 = vld [vmem:[#allocation2 + $0x48] sm:$0xff]
    %v126 = vld [vmem:[#allocation2 + $0x50] sm:$0xff]
    %v127 = vld [vmem:[#allocation2 + $0x58] sm:$0xff]
    %v128 = vld [vmem:[#allocation2 + $0x60] sm:$0xff]
    %v129 = vld [vmem:[#allocation2 + $0x68] sm:$0xff]
    %v130 = vld [vmem:[#allocation2 + $0x70] sm:$0xff]
    %v131 = vld [vmem:[#allocation2 + $0x78] sm:$0xff]
    %132 = vmatprep.subr.mxu0 0.0
    %133 = vmatpush1.msra.mxu0 %v116
    %134 = vmatprep.subr.mxu0 0.0
    %135 = vmatpush1.msra.mxu0 %v117
    %136 = vmatprep.subr.mxu0 0.0
    %137 = vmatpush1.msra.mxu0 %v118
    %138 = vmatprep.subr.mxu0 0.0
    %139 = vmatpush1.msra.mxu0 %v119
    %140 = vmatprep.subr.mxu0 0.0
    %141 = vmatpush1.msra.mxu0 %v120
    %142 = vmatprep.subr.mxu0 0.0
    %143 = vmatpush1.msra.mxu0 %v121
    %144 = vmatprep.subr.mxu0 0.0
    %145 = vmatpush1.msra.mxu0 %v122
    %146 = vmatprep.subr.mxu0 0.0
    %147 = vmatpush1.msra.mxu0 %v123
    %148 = vmatprep.subr.mxu0 0.0
    %149 = vmatpush1.msra.mxu0 %v124
    %150 = vmatprep.subr.mxu0 0.0
    %151 = vmatpush1.msra.mxu0 %v125
    %152 = vmatprep.subr.mxu0 0.0
    %153 = vmatpush1.msra.mxu0 %v126
    %154 = vmatprep.subr.mxu0 0.0
    %155 = vmatpush1.msra.mxu0 %v127
    %156 = vmatprep.subr.mxu0 0.0
    %157 = vmatpush1.msra.mxu0 %v128
    %158 = vmatprep.subr.mxu0 0.0
    %159 = vmatpush1.msra.mxu0 %v129
    %160 = vmatprep.subr.mxu0 0.0
    %161 = vmatpush1.msra.mxu0 %v130
    %162 = vmatprep.subr.mxu0 0.0
    %163 = vmatpush1.msra.mxu0 %v131
    %164 = vmatprep.subr.mxu0 0.0
    %165 = vmatpush1.msra.mxu0 0.0
    %166 = vmatprep.subr.mxu0 0.0
    %167 = vmatpush1.msra.mxu0 0.0
    %168 = vmatprep.subr.mxu0 0.0
    %169 = vmatpush1.msra.mxu0 0.0
    %170 = vmatprep.subr.mxu0 0.0
    %171 = vmatpush1.msra.mxu0 0.0
    %172 = vmatprep.subr.mxu0 0.0
    %173 = vmatpush1.msra.mxu0 0.0
    %174 = vmatprep.subr.mxu0 0.0
    %175 = vmatpush1.msra.mxu0 0.0
    %176 = vmatprep.subr.mxu0 0.0
    %177 = vmatpush1.msra.mxu0 0.0
    %178 = vmatprep.subr.mxu0 0.0
    %179 = vmatpush1.msra.mxu0 0.0
    %180 = vmatprep.subr.mxu0 0.0
    %181 = vmatpush1.msra.mxu0 0.0
    %182 = vmatprep.subr.mxu0 0.0
    %183 = vmatpush1.msra.mxu0 0.0
    %184 = vmatprep.subr.mxu0 0.0
    %185 = vmatpush1.msra.mxu0 0.0
    %186 = vmatprep.subr.mxu0 0.0
    %187 = vmatpush1.msra.mxu0 0.0
    %188 = vmatprep.subr.mxu0 0.0
    %189 = vmatpush1.msra.mxu0 0.0
    %190 = vmatprep.subr.mxu0 0.0
    %191 = vmatpush1.msra.mxu0 0.0
    %192 = vmatprep.subr.mxu0 0.0
    %193 = vmatpush1.msra.mxu0 0.0
    %194 = vmatprep.subr.mxu0 0.0
    %195 = vmatpush1.msra.mxu0 0.0
    %196 = vmatprep.mubr.f32.mxu0 0.0
    %197 = vmatmul.mubr.f32.gmra.mrb[0].mxu0 %v110
    %v198 = vpop.f32.mrb[0].mxu0
    %v199 = vadd.f32 0.0, %v198
    %v200 = vpop.f32.mrb[0].mxu0
    %201 = vmatprep.mubr.f32.mxu0 0.0
    %202 = vmatmul.mubr.f32.gmra.mrb[0].mxu0 %v113
    %v203 = vpop.f32.mrb[0].mxu0
    %v204 = vadd.f32 0.0, %v203
    %v205 = vpop.f32.mrb[0].mxu0
    %206 = vdwg.mxu0
    %v207 = vld [vmem:[%s6] sm:$0xff]
    %vm208 = vcmask 64512
    %v210 = vsel %vm208, %v199, 0
    %v213 = vsel %vm208, %v204, 0
    %215 = vmatprep.subr.mxu0 0.0
    %216 = vmatpush1.msra.mxu0 %v207
    %217 = vmatprep.subr.mxu0 0.0
    %218 = vmatpush1.msra.mxu0 0.0
    %219 = vmatprep.subr.mxu0 0.0
    %220 = vmatpush1.msra.mxu0 0.0
    %221 = vmatprep.subr.mxu0 0.0
    %222 = vmatpush1.msra.mxu0 0.0
    %223 = vmatprep.subr.mxu0 0.0
    %224 = vmatpush1.msra.mxu0 0.0
    %225 = vmatprep.subr.mxu0 0.0
    %226 = vmatpush1.msra.mxu0 0.0
    %227 = vmatprep.subr.mxu0 0.0
    %228 = vmatpush1.msra.mxu0 0.0
    %229 = vmatprep.subr.mxu0 0.0
    %230 = vmatpush1.msra.mxu0 0.0
    %231 = vmatprep.subr.mxu0 0.0
    %232 = vmatpush1.msra.mxu0 0.0
    %233 = vmatprep.subr.mxu0 0.0
    %234 = vmatpush1.msra.mxu0 0.0
    %235 = vmatprep.subr.mxu0 0.0
    %236 = vmatpush1.msra.mxu0 0.0
    %237 = vmatprep.subr.mxu0 0.0
    %238 = vmatpush1.msra.mxu0 0.0
    %239 = vmatprep.subr.mxu0 0.0
    %240 = vmatpush1.msra.mxu0 0.0
    %241 = vmatprep.subr.mxu0 0.0
    %242 = vmatpush1.msra.mxu0 0.0
    %243 = vmatprep.subr.mxu0 0.0
    %244 = vmatpush1.msra.mxu0 0.0
    %245 = vmatprep.subr.mxu0 0.0
    %246 = vmatpush1.msra.mxu0 0.0
    %247 = vmatprep.subr.mxu0 0.0
    %248 = vmatpush1.msra.mxu0 0.0
    %249 = vmatprep.subr.mxu0 0.0
    %250 = vmatpush1.msra.mxu0 0.0
    %251 = vmatprep.subr.mxu0 0.0
    %252 = vmatpush1.msra.mxu0 0.0
    %253 = vmatprep.subr.mxu0 0.0
    %254 = vmatpush1.msra.mxu0 0.0
    %255 = vmatprep.subr.mxu0 0.0
    %256 = vmatpush1.msra.mxu0 0.0
    %257 = vmatprep.subr.mxu0 0.0
    %258 = vmatpush1.msra.mxu0 0.0
    %259 = vmatprep.subr.mxu0 0.0
    %260 = vmatpush1.msra.mxu0 0.0
    %261 = vmatprep.subr.mxu0 0.0
    %262 = vmatpush1.msra.mxu0 0.0
    %263 = vmatprep.subr.mxu0 0.0
    %264 = vmatpush1.msra.mxu0 0.0
    %265 = vmatprep.subr.mxu0 0.0
    %266 = vmatpush1.msra.mxu0 0.0
    %267 = vmatprep.subr.mxu0 0.0
    %268 = vmatpush1.msra.mxu0 0.0
    %269 = vmatprep.subr.mxu0 0.0
    %270 = vmatpush1.msra.mxu0 0.0
    %271 = vmatprep.subr.mxu0 0.0
    %272 = vmatpush1.msra.mxu0 0.0
    %273 = vmatprep.subr.mxu0 0.0
    %274 = vmatpush1.msra.mxu0 0.0
    %275 = vmatprep.subr.mxu0 0.0
    %276 = vmatpush1.msra.mxu0 0.0
    %277 = vmatprep.subr.mxu0 0.0
    %278 = vmatpush1.msra.mxu0 0.0
    %279 = vmatprep.mubr.f32.mxu0 0.0
    %280 = vmatmul.mubr.f32.gmra.mrb[0].mxu0 %v210
    %v281 = vpop.f32.mrb[0].mxu0
    %v282 = vadd.f32 0.0, %v281
    %v283 = vpop.f32.mrb[0].mxu0
    %284 = vmatprep.mubr.f32.mxu0 0.0
    %285 = vmatmul.mubr.f32.gmra.mrb[0].mxu0 %v213
    %v286 = vpop.f32.mrb[0].mxu0
    %v287 = vadd.f32 0.0, %v286
    %v288 = vpop.f32.mrb[0].mxu0
    %289 = vdwg.mxu0
    %v290 = vsub.f32 %v110, %v282
    %v291 = vsub.f32 %v113, %v287
    %v292 = vmul.f32 %v290, %v290
    %v293 = vmul.f32 %v291, %v291
    %294 = vmatprep.subr.mxu0 0.0
    %295 = vmatpush1.msra.mxu0 %v116
    %296 = vmatprep.subr.mxu0 0.0
    %297 = vmatpush1.msra.mxu0 %v117
    %298 = vmatprep.subr.mxu0 0.0
    %299 = vmatpush1.msra.mxu0 %v118
    %300 = vmatprep.subr.mxu0 0.0
    %301 = vmatpush1.msra.mxu0 %v119
    %302 = vmatprep.subr.mxu0 0.0
    %303 = vmatpush1.msra.mxu0 %v120
    %304 = vmatprep.subr.mxu0 0.0
    %305 = vmatpush1.msra.mxu0 %v121
    %306 = vmatprep.subr.mxu0 0.0
    %307 = vmatpush1.msra.mxu0 %v122
    %308 = vmatprep.subr.mxu0 0.0
    %309 = vmatpush1.msra.mxu0 %v123
    %310 = vmatprep.subr.mxu0 0.0
    %311 = vmatpush1.msra.mxu0 %v124
    %312 = vmatprep.subr.mxu0 0.0
    %313 = vmatpush1.msra.mxu0 %v125
    %314 = vmatprep.subr.mxu0 0.0
    %315 = vmatpush1.msra.mxu0 %v126
    %316 = vmatprep.subr.mxu0 0.0
    %317 = vmatpush1.msra.mxu0 %v127
    %318 = vmatprep.subr.mxu0 0.0
    %319 = vmatpush1.msra.mxu0 %v128
    %320 = vmatprep.subr.mxu0 0.0
    %321 = vmatpush1.msra.mxu0 %v129
    %322 = vmatprep.subr.mxu0 0.0
    %323 = vmatpush1.msra.mxu0 %v130
    %324 = vmatprep.subr.mxu0 0.0
    %325 = vmatpush1.msra.mxu0 %v131
    %326 = vmatprep.subr.mxu0 0.0
    %327 = vmatpush1.msra.mxu0 0.0
    %328 = vmatprep.subr.mxu0 0.0
    %329 = vmatpush1.msra.mxu0 0.0
    %330 = vmatprep.subr.mxu0 0.0
    %331 = vmatpush1.msra.mxu0 0.0
    %332 = vmatprep.subr.mxu0 0.0
    %333 = vmatpush1.msra.mxu0 0.0
    %334 = vmatprep.subr.mxu0 0.0
    %335 = vmatpush1.msra.mxu0 0.0
    %336 = vmatprep.subr.mxu0 0.0
    %337 = vmatpush1.msra.mxu0 0.0
    %338 = vmatprep.subr.mxu0 0.0
    %339 = vmatpush1.msra.mxu0 0.0
    %340 = vmatprep.subr.mxu0 0.0
    %341 = vmatpush1.msra.mxu0 0.0
    %342 = vmatprep.subr.mxu0 0.0
    %343 = vmatpush1.msra.mxu0 0.0
    %344 = vmatprep.subr.mxu0 0.0
    %345 = vmatpush1.msra.mxu0 0.0
    %346 = vmatprep.subr.mxu0 0.0
    %347 = vmatpush1.msra.mxu0 0.0
    %348 = vmatprep.subr.mxu0 0.0
    %349 = vmatpush1.msra.mxu0 0.0
    %350 = vmatprep.subr.mxu0 0.0
    %351 = vmatpush1.msra.mxu0 0.0
    %352 = vmatprep.subr.mxu0 0.0
    %353 = vmatpush1.msra.mxu0 0.0
    %354 = vmatprep.subr.mxu0 0.0
    %355 = vmatpush1.msra.mxu0 0.0
    %356 = vmatprep.subr.mxu0 0.0
    %357 = vmatpush1.msra.mxu0 0.0
    %358 = vmatprep.mubr.f32.mxu0 0.0
    %359 = vmatmul.mubr.f32.gmra.mrb[0].mxu0 %v292
    %v360 = vpop.f32.mrb[0].mxu0
    %v361 = vadd.f32 0.0, %v360
    %v362 = vpop.f32.mrb[0].mxu0
    %363 = vmatprep.mubr.f32.mxu0 0.0
    %364 = vmatmul.mubr.f32.gmra.mrb[0].mxu0 %v293
    %v365 = vpop.f32.mrb[0].mxu0
    %v366 = vadd.f32 0.0, %v365
    %v367 = vpop.f32.mrb[0].mxu0
    %368 = vdwg.mxu0
    %v370 = vsel %vm208, %v361, 0
    %v373 = vsel %vm208, %v366, 0
    %375 = vmatprep.subr.mxu0 0.0
    %376 = vmatpush1.msra.mxu0 %v207
    %377 = vmatprep.subr.mxu0 0.0
    %378 = vmatpush1.msra.mxu0 0.0
    %379 = vmatprep.subr.mxu0 0.0
    %380 = vmatpush1.msra.mxu0 0.0
    %381 = vmatprep.subr.mxu0 0.0
    %382 = vmatpush1.msra.mxu0 0.0
    %383 = vmatprep.subr.mxu0 0.0
    %384 = vmatpush1.msra.mxu0 0.0
    %385 = vmatprep.subr.mxu0 0.0
    %386 = vmatpush1.msra.mxu0 0.0
    %387 = vmatprep.subr.mxu0 0.0
    %388 = vmatpush1.msra.mxu0 0.0
    %389 = vmatprep.subr.mxu0 0.0
    %390 = vmatpush1.msra.mxu0 0.0
    %391 = vmatprep.subr.mxu0 0.0
    %392 = vmatpush1.msra.mxu0 0.0
    %393 = vmatprep.subr.mxu0 0.0
    %394 = vmatpush1.msra.mxu0 0.0
    %395 = vmatprep.subr.mxu0 0.0
    %396 = vmatpush1.msra.mxu0 0.0
    %397 = vmatprep.subr.mxu0 0.0
    %398 = vmatpush1.msra.mxu0 0.0
    %399 = vmatprep.subr.mxu0 0.0
    %400 = vmatpush1.msra.mxu0 0.0
    %401 = vmatprep.subr.mxu0 0.0
    %402 = vmatpush1.msra.mxu0 0.0
    %403 = vmatprep.subr.mxu0 0.0
    %404 = vmatpush1.msra.mxu0 0.0
    %405 = vmatprep.subr.mxu0 0.0
    %406 = vmatpush1.msra.mxu0 0.0
    %407 = vmatprep.subr.mxu0 0.0
    %408 = vmatpush1.msra.mxu0 0.0
    %409 = vmatprep.subr.mxu0 0.0
    %410 = vmatpush1.msra.mxu0 0.0
    %411 = vmatprep.subr.mxu0 0.0
    %412 = vmatpush1.msra.mxu0 0.0
    %413 = vmatprep.subr.mxu0 0.0
    %414 = vmatpush1.msra.mxu0 0.0
    %415 = vmatprep.subr.mxu0 0.0
    %416 = vmatpush1.msra.mxu0 0.0
    %417 = vmatprep.subr.mxu0 0.0
    %418 = vmatpush1.msra.mxu0 0.0
    %419 = vmatprep.subr.mxu0 0.0
    %420 = vmatpush1.msra.mxu0 0.0
    %421 = vmatprep.subr.mxu0 0.0
    %422 = vmatpush1.msra.mxu0 0.0
    %423 = vmatprep.subr.mxu0 0.0
    %424 = vmatpush1.msra.mxu0 0.0
    %425 = vmatprep.subr.mxu0 0.0
    %426 = vmatpush1.msra.mxu0 0.0
    %427 = vmatprep.subr.mxu0 0.0
    %428 = vmatpush1.msra.mxu0 0.0
    %429 = vmatprep.subr.mxu0 0.0
    %430 = vmatpush1.msra.mxu0 0.0
    %431 = vmatprep.subr.mxu0 0.0
    %432 = vmatpush1.msra.mxu0 0.0
    %433 = vmatprep.subr.mxu0 0.0
    %434 = vmatpush1.msra.mxu0 0.0
    %435 = vmatprep.subr.mxu0 0.0
    %436 = vmatpush1.msra.mxu0 0.0
    %437 = vmatprep.subr.mxu0 0.0
    %438 = vmatpush1.msra.mxu0 0.0
    %439 = vmatprep.mubr.f32.mxu0 0.0
    %440 = vmatmul.mubr.f32.gmra.mrb[0].mxu0 %v370
    %v441 = vpop.f32.mrb[0].mxu0
    %v442 = vadd.f32 1e-06, %v441
    %v443 = vpop.f32.mrb[0].mxu0
    %444 = vmatprep.mubr.f32.mxu0 0.0
    %445 = vmatmul.mubr.f32.gmra.mrb[0].mxu0 %v373
    %v446 = vpop.f32.mrb[0].mxu0
    %v447 = vadd.f32 1e-06, %v446
    %v448 = vpop.f32.mrb[0].mxu0
    %449 = vdwg.mxu0
    %v450 = vrsqrt.pop %v442
    %v451 = vrsqrt.pop %v447
    %v452 = vmul.f32 %v290, %v450
    %v453 = vmul.f32 %v291, %v451
    %v454 = vld [vmem:[%s3] sm:$0x1]
    %v456 = vlaneseq
    %v457 = vshrl.u32 %v456, 7
    %v458 = vsub.s32 0, %v457
    %v459 = vrot.slane %v454, %v458
    %v461 = vmul.f32 %v459, %v452
    %v462 = vmul.f32 %v459, %v453
    %v463 = vld [vmem:[%s4] sm:$0x1]
    %v465 = vlaneseq
    %v466 = vshrl.u32 %v465, 7
    %v467 = vsub.s32 0, %v466
    %v468 = vrot.slane %v463, %v467
    %v470 = vadd.f32 %v461, %v468
    %v471 = vadd.f32 %v462, %v468
    %v472 = vand.u32 2147483647, %v470
    %v473 = vand.u32 2147483647, %v471
    %v474 = vmul.f32 %v472, 0.23164189
    %v475 = vmul.f32 %v473, 0.23164189
    %v476 = vadd.f32 %v474, 1.0
    %v477 = vadd.f32 %v475, 1.0
    %v478 = vrcp.pop %v476
    %v479 = vrcp.pop %v477
    %v480 = vmul.f32 %v478, 0.5307027
    %v481 = vmul.f32 %v479, 0.5307027
    %v482 = vadd.f32 %v480, -0.72657603
    %v483 = vadd.f32 %v481, -0.72657603
    %v484 = vmul.f32 %v482, %v478
    %v485 = vmul.f32 %v483, %v479
    %v486 = vadd.f32 %v484, 0.7107069
    %v487 = vadd.f32 %v485, 0.7107069
    %v488 = vmul.f32 %v486, %v478
    %v489 = vmul.f32 %v487, %v479
    %v490 = vadd.f32 %v488, -0.14224836
    %v491 = vadd.f32 %v489, -0.14224836
    %v492 = vmul.f32 %v490, %v478
    %v493 = vmul.f32 %v491, %v479
    %v494 = vadd.f32 %v492, 0.1274148
    %v495 = vadd.f32 %v493, 0.1274148
    %v496 = vmul.f32 %v494, %v478
    %v497 = vmul.f32 %v495, %v479
    %v498 = vmax.f32 %v470, 0.0
    %v499 = vmax.f32 %v471, 0.0
    %v500 = vmul.f32 %v472, %v496
    %v501 = vmul.f32 %v473, %v497
    %v502 = vmul.f32 %v470, %v470
    %v503 = vmul.f32 %v471, %v471
    %v504 = vmul.f32 %v502, -0.5
    %v505 = vmul.f32 %v503, -0.5
    %v506 = vmul.f32 %v504, 1.442695
    %v507 = vpow.pop %v506
    %v508 = vmul.f32 %v505, 1.442695
    %v509 = vpow.pop %v508
    %v510 = vmul.f32 %v500, %v507
    %v511 = vmul.f32 %v501, %v509
    %v512 = vsub.f32 %v498, %v510
    %v513 = vsub.f32 %v499, %v511
    %v514 = vpack.c.bf16 %v513, %v512
    %v516 = vunpack.c.l.b16 %v514
    %v517 = vunpack.c.h.b16 %v514
    %v518 = vpack.c.b16 %v516, %v516
    %v519 = vpack.c.b16 %v517, %v517
    %522 = vst [vmem:[%s7] sm:$0xf] %v518
    %523 = vst [vmem:[%s7 + $0x4] sm:$0xf] %v519
    // Predicated region
    $region34: #{_lambda_.2} parent=1 // pred_check
      _
    $region35: #{_lambda_.2} parent=1 // pred_check_branch
      %525 = sbr.rel (0) target = $region37
    $region36: #{_lambda_.2} parent=1 // pred_region
      _
    $region37: #{_lambda_.2} parent=1 // pred_fallthru
      _
    // Predicated region
    $region38: #{_lambda_.2} parent=1 // pred_check
      _
    $region39: #{_lambda_.2} parent=1 // pred_check_branch
      %527 = sbr.rel (0) target = $region41
    $region40: #{_lambda_.2} parent=1 // pred_region
      _
    $region41: #{_lambda_.2} parent=1 // pred_fallthru
      _
    %528 = vsyncpa [#allocation3], 1

</llo_original>
